<compile_context>
chip_gen: v6e
topology: v6e:2x2x1
jax: 0.10.0
libtpu: 0.0.40
codegen_flags: <defaults>
</compile_context>

<pallas_src>
import functools

import jax
import jax.numpy as jnp
from jax.experimental import pallas as pl
from jax.experimental.pallas import tpu as pltpu


def _round_up(v, m):
    return ((v + m - 1) // m) * m


# ---------------------------------------------------------------------------
# Pallas kernel: fused QK^T -> masked softmax -> PV for one (batch, head) pair
# ---------------------------------------------------------------------------
def _mha_kernel(x_ref, o_ref, *, seq_len, scale):
    # x_ref: (1, T_pad, d_pad)  -- q = k = v for this (b, h)
    # o_ref: (1, T_pad, d_pad)
    x = x_ref[0]                                                  # (T_pad, d_pad)

    # scores = (q @ k^T) * scale   (contract over the padded head dim; zero pad is inert)
    s = jax.lax.dot_general(
        x, x, dimension_numbers=(((1,), (1,)), ((), ())),
        preferred_element_type=jnp.float32) * scale               # (T_pad, T_pad)

    # mask padded key columns so they get zero softmax weight
    kidx = jax.lax.broadcasted_iota(jnp.int32, s.shape, 1)
    s = jnp.where(kidx < seq_len, s, -1e30)

    # numerically-stable softmax (row-wise over keys)
    m = jnp.max(s, axis=-1, keepdims=True)
    p = jnp.exp(s - m)
    l = jnp.sum(p, axis=-1, keepdims=True)

    # TODO(synk): att_drop (Dropout p=0.1) omitted -- eval/inference semantics (identity).
    o = jnp.dot(p, x, preferred_element_type=jnp.float32) / l     # (T_pad, d_pad)
    o_ref[0] = o.astype(o_ref.dtype)


# ---------------------------------------------------------------------------
# Wrapper (glue): head split, lane padding, pallas_call, head merge
# ---------------------------------------------------------------------------
@functools.partial(jax.jit, static_argnames=("num_heads",))
def cvt_mha(x, *, num_heads):
    """x: (B, T, C) with C % num_heads == 0.  Returns (B, T, C)."""
    B, T, C = x.shape
    assert C % num_heads == 0
    d = C // num_heads

    # NOTE: forward_conv() in the reference is dead code for the output (its q/k/v are
    # overwritten by rearrange(x, ...)), so the conv + BatchNorm path is skipped entirely.

    # rearrange 'b t (d H) -> b H t d'  (head index is the inner factor of C)
    qkv = x.reshape(B, T, d, num_heads).transpose(0, 3, 1, 2)      # (B, H, T, d)
    qkv = qkv.reshape(B * num_heads, T, d)                         # (BH, T, d)

    # pad T and d to multiples of 128 for lane-dense loads / MXU feed / stores
    T_pad = _round_up(T, 128)
    d_pad = _round_up(d, 128)
    qkv_p = jnp.pad(qkv, ((0, 0), (0, T_pad - T), (0, d_pad - d)))

    scale = 1.0 / (num_heads ** 0.5)   # reference scales by sqrt(num_heads), NOT sqrt(d)
    BH = B * num_heads

    kernel = functools.partial(_mha_kernel, seq_len=T, scale=scale)

    cost = pl.CostEstimate(
        flops=4 * BH * T_pad * T_pad * d_pad,            # QK^T + PV
        transcendentals=BH * T_pad * T_pad,              # exp
        bytes_accessed=2 * BH * T_pad * d_pad * 4,       # in + out (f32)
    )

    out = pl.pallas_call(
        kernel,
        out_shape=jax.ShapeDtypeStruct((BH, T_pad, d_pad), x.dtype),
        grid_spec=pltpu.PrefetchScalarGridSpec(
            num_scalar_prefetch=0,
            grid=(BH,),
            in_specs=[pl.BlockSpec((1, T_pad, d_pad), lambda i: (i, 0, 0))],
            out_specs=pl.BlockSpec((1, T_pad, d_pad), lambda i: (i, 0, 0)),
        ),
        compiler_params=pltpu.CompilerParams(
            dimension_semantics=("parallel",)),
        cost_estimate=cost,
    )(qkv_p)

    # drop padding, rearrange 'b H t d -> b t (H d)'  (heads merged with H outer)
    out = out[:, :T, :d].reshape(B, num_heads, T, d)
    out = out.transpose(0, 2, 1, 3).reshape(B, T, num_heads * d)
    return out


# ---------------------------------------------------------------------------
# Pure-JAX reference (mirrors the PyTorch forward in eval mode)
# ---------------------------------------------------------------------------
def cvt_mha_ref(x, *, num_heads):
    B, T, C = x.shape
    d = C // num_heads
    q = x.reshape(B, T, d, num_heads).transpose(0, 3, 1, 2)        # b H t d
    k = q
    v = q
    att = jnp.einsum("bhtd,bhsd->bhts", q, k) / (num_heads ** 0.5)
    att = jax.nn.softmax(att, axis=-1)
    out = jnp.einsum("bhts,bhsd->bhtd", att, v)
    out = out.transpose(0, 2, 1, 3).reshape(B, T, num_heads * d)   # b t (H d)
    return out


if __name__ == "__main__":
    # small shapes consistent with the module: T = 8*8 spatial positions, C = d*H
    B, T, C, H = 2, 64, 32, 4       # head dim d = 8

    key = jax.random.PRNGKey(0)
    x = jax.random.normal(key, (B, T, C), dtype=jnp.float32)

    out = cvt_mha(x, num_heads=H)
    out = jax.block_until_ready(out)

    ref = cvt_mha_ref(x, num_heads=H)
    assert out.shape == (B, T, C), out.shape
    assert jnp.allclose(out, ref, atol=1e-4, rtol=1e-4), \
        float(jnp.max(jnp.abs(out - ref)))

    print("KERNEL_OK")
</pallas_src>

<mosaic_0001>
module attributes {stable_mosaic.version = 11 : i64} {
  func.func @_mha_kernel(%arg0: i32, %arg1: memref<1x128x128xf32, #tpu.memory_space<vmem>>, %arg2: memref<1x128x128xf32, #tpu.memory_space<vmem>>) attributes {dimension_semantics = [#tpu.dimension_semantics<parallel>], iteration_bounds = array<i64: 8>, scalar_prefetch = 0 : i64, scratch_operands = 0 : i64, tpu.core_type = #tpu.core_type<tc>, window_params = [{transform_indices = @transform_0, window_bounds = array<i64: 1, 128, 128>}, {transform_indices = @transform_1, window_bounds = array<i64: 1, 128, 128>}]} {
    %c0 = arith.constant 0 : index
    %c0_0 = arith.constant 0 : index
    %c0_1 = arith.constant 0 : index
    %0 = vector.load %arg1[%c0, %c0_0, %c0_1] : memref<1x128x128xf32, #tpu.memory_space<vmem>>, vector<1x128x128xf32>
    %1 = vector.shape_cast %0 : vector<1x128x128xf32> to vector<128x128xf32>
    %cst = arith.constant dense<0.000000e+00> : vector<128x128xf32>
    %2 = tpu.matmul %1, %1, %cst {dimension_numbers = #tpu.dot_dimension_numbers<[1], [1], [0], [0], [0, 0, 1, 0], [], []>} : vector<128x128xf32>, vector<128x128xf32>, vector<128x128xf32> -> vector<128x128xf32>
    %cst_2 = arith.constant 5.000000e-01 : f32
    %3 = vector.broadcast %cst_2 : f32 to vector<128x128xf32>
    %4 = arith.mulf %2, %3 : vector<128x128xf32>
    %5 = tpu.iota {dimensions = array<i32: 1>} : vector<128x128xi32>
    %c64_i32 = arith.constant 64 : i32
    %6 = vector.broadcast %c64_i32 : i32 to vector<128x128xi32>
    %7 = arith.cmpi slt, %5, %6 : vector<128x128xi32>
    %cst_3 = arith.constant -1.000000e+30 : f32
    %8 = vector.broadcast %cst_3 : f32 to vector<128x128xf32>
    %9 = arith.select %7, %4, %8 : vector<128x128xi1>, vector<128x128xf32>
    %cst_4 = arith.constant dense<0xFF800000> : vector<128xf32>
    %10 = vector.multi_reduction <maximumf>, %9, %cst_4 [1] : vector<128x128xf32> to vector<128xf32>
    %11 = vector.shape_cast %10 : vector<128xf32> to vector<128x1xf32>
    %12 = vector.broadcast %11 : vector<128x1xf32> to vector<128x128xf32>
    %13 = arith.subf %9, %12 : vector<128x128xf32>
    %14 = math.exp %13 : vector<128x128xf32>
    %cst_5 = arith.constant dense<0.000000e+00> : vector<128xf32>
    %15 = vector.multi_reduction <add>, %14, %cst_5 [1] : vector<128x128xf32> to vector<128xf32>
    %16 = vector.shape_cast %15 : vector<128xf32> to vector<128x1xf32>
    %cst_6 = arith.constant dense<0.000000e+00> : vector<128x128xf32>
    %17 = tpu.matmul %14, %1, %cst_6 {dimension_numbers = #tpu.dot_dimension_numbers<[1], [0], [0], [1], [0, 0, 1, 1], [], []>} : vector<128x128xf32>, vector<128x128xf32>, vector<128x128xf32> -> vector<128x128xf32>
    %18 = vector.broadcast %16 : vector<128x1xf32> to vector<128x128xf32>
    %19 = arith.divf %17, %18 : vector<128x128xf32>
    %c0_7 = arith.constant 0 : index
    %c0_8 = arith.constant 0 : index
    %c0_9 = arith.constant 0 : index
    %20 = vector.load %arg2[%c0_7, %c0_8, %c0_9] : memref<1x128x128xf32, #tpu.memory_space<vmem>>, vector<1x128x128xf32>
    %21 = vector.shape_cast %20 : vector<1x128x128xf32> to vector<128x128xf32>
    %22 = vector.shape_cast %19 : vector<128x128xf32> to vector<1x128x128xf32>
    tpu.vector_store %arg2[%c0_7, %c0_8, %c0_9], %22 {strides = array<i32>} : memref<1x128x128xf32, #tpu.memory_space<vmem>>, vector<1x128x128xf32>,
    return
  }
  func.func @transform_0(%arg0: i32) -> (i32, i32, i32) {
    %c0_i32 = arith.constant 0 : i32
    %c0_i32_0 = arith.constant 0 : i32
    %c0_i32_1 = arith.constant 0 : i32
    return %arg0, %c0_i32, %c0_i32_0 : i32, i32, i32
  }
  func.func @transform_1(%arg0: i32) -> (i32, i32, i32) {
    %c0_i32 = arith.constant 0 : i32
    %c0_i32_0 = arith.constant 0 : i32
    %c0_i32_1 = arith.constant 0 : i32
    return %arg0, %c0_i32, %c0_i32_0 : i32, i32, i32
  }
}

</mosaic_0001>

<llo_original>
// kernel: cvt_mha.1
$region0: #{cvt_mha.1}
  #allocation0 [shape = 'u32[]', space=smem, size = 0x4, offset = 0x4, fixed_abs, tag = 'smem constant byte address 0x4 - core index']
  #allocation1 [shape = 'u32[144,128]{1,0:T(1,128)}', space=vmem, size = 0x12000, scoped, tag = 'internal scratch']
  %s0 = inlined_call_operand.vmem [shape: f32[8,128,128], index: 0, kind: input, shape index: {}]
  %s1 = inlined_call_operand.vmem [shape: f32[8,128,128], index: 1, kind: output, shape index: {}]
  %s2 = sld [smem:[#allocation0]]
  $region37: #{cvt_mha.1} parent=0
    _
  %s4 = ssub.s32 1, %s2
  %s5 = scalar_select 0, %s4, %s2
  loop: start=0, step=1, limit=10
  $region2: #{cvt_mha.1} parent=0 // loop_pre_header
    _
  $region3: #{cvt_mha.1} parent=0 // loop_header
    %s7 = sphi 0, %s11
    %p8 = scmp.ge.s32.totalorder %s7, 10
    %s17 = sphi 0, %s19
    %s20 = sphi 0, %s17
    %s21 = sphi 0, %s20
    %s37 = sphi 0, %s21
    %s43 = sphi 0, %s45
    %s46 = sphi 0, %s43
    %s47 = sphi 0, %s46
    %s63 = sphi 0, %s47
  $region4: #{cvt_mha.1} parent=0 // loop_header_branch
    %10 = sbr.rel (%p8) target = $region8
  $region5: #{cvt_mha.1} parent=0 // loop_body
    %s12 = ssub.s32 %s7, 1
    %s13 = ssub.s32 %s7, 2
    %s14 = sadd.s32 %s7, 1
    %s15 = ssub.s32 %s7, %s14
    %p16 = scmp.eq.s32.totalorder %s15, 0
    %s18 = sadd.s32 %s17, 1
    %s19 = scalar_select %p16, %s17, %s18
    %p22 = pneg %p16
    %p23 = scmp.eq.s32.totalorder %s7, 7
    %p24 = por %p22, %p23
    %p25 = scmp.ne.s32.totalorder %s17, %s20
    %p26 = scmp.eq.s32.totalorder %s7, 0
    %p27 = por %p25, %p26
    %p28 = scmp.ne.s32.totalorder %s17, %s20
    %p29 = scmp.eq.s32.totalorder %s12, 7
    %p30 = por %p28, %p29
    %p31 = scmp.ne.s32.totalorder %s20, %s21
    %p32 = scmp.eq.s32.totalorder %s12, 0
    %p33 = por %p31, %p32
    %p34 = scmp.ne.s32.totalorder %s20, %s21
    %p35 = scmp.eq.s32.totalorder %s13, 7
    %p36 = por %p34, %p35
    %p38 = scmp.ne.s32.totalorder %s21, %s37
    %p39 = scmp.eq.s32.totalorder %s13, 0
    %p40 = por %p38, %p39
    %s41 = ssub.s32 %s7, %s14
    %p42 = scmp.eq.s32.totalorder %s41, 0
    %s44 = sadd.s32 %s43, 1
    %s45 = scalar_select %p42, %s43, %s44
    %p48 = pneg %p42
    %p49 = scmp.eq.s32.totalorder %s7, 7
    %p50 = por %p48, %p49
    %p51 = scmp.ne.s32.totalorder %s43, %s46
    %p52 = scmp.eq.s32.totalorder %s7, 0
    %p53 = por %p51, %p52
    %p54 = scmp.ne.s32.totalorder %s43, %s46
    %p55 = scmp.eq.s32.totalorder %s12, 7
    %p56 = por %p54, %p55
    %p57 = scmp.ne.s32.totalorder %s46, %s47
    %p58 = scmp.eq.s32.totalorder %s12, 0
    %p59 = por %p57, %p58
    %p60 = scmp.ne.s32.totalorder %s46, %s47
    %p61 = scmp.eq.s32.totalorder %s13, 7
    %p62 = por %p60, %p61
    %p64 = scmp.ne.s32.totalorder %s47, %s63
    %p65 = scmp.eq.s32.totalorder %s13, 0
    %p66 = por %p64, %p65
    %p67 = scmp.le.s32.totalorder 1, %s7
    %p68 = scmp.lt.s32.totalorder %s7, 9
    %p69 = pnand %p67, %p68
    %p70 = pneg %p69
    // Predicated region
    $region9: #{cvt_mha.1} parent=5 // pred_check
      _
    $region10: #{cvt_mha.1} parent=5 // pred_check_branch
      %72 = sbr.rel (%p69) target = $region12
    $region11: #{cvt_mha.1} parent=5 // pred_region
      %s73 = ssub.s32 %s7, 1
    $region12: #{cvt_mha.1} parent=5 // pred_fallthru
      _
    %p74 = scmp.lt.s32.totalorder %s7, 8
    // Predicated region
    $region13: #{cvt_mha.1} parent=5 // pred_check
      %p75 = pneg %p74
    $region14: #{cvt_mha.1} parent=5 // pred_check_branch
      %77 = sbr.rel (%p75) target = $region16
    $region15: #{cvt_mha.1} parent=5 // pred_region
      // Predicated region
      $region17: #{cvt_mha.1} parent=15 // pred_check
        %p78 = pneg %p27
      $region18: #{cvt_mha.1} parent=15 // pred_check_branch
        %80 = sbr.rel (%p78) target = $region20
      $region19: #{cvt_mha.1} parent=15 // pred_region
        %p81 = scmp.lt.s32.totalorder %s7, 7
        %s82 = scalar_select %p81, %s7, 7
        %s83 = smul.addr %s82, 16
        %s84 = smul.addr %s83, 8
        %s85 = scalar_lea.vmem %s0, %s84
      $region20: #{cvt_mha.1} parent=15 // pred_fallthru
        _
    $region16: #{cvt_mha.1} parent=5 // pred_fallthru
      _
    %p86 = scmp.le.s32.totalorder 1, %s7
    %p87 = scmp.lt.s32.totalorder %s7, 9
    %p88 = pnand %p86, %p87
    %p89 = pneg %p88
    // Predicated region
    $region21: #{cvt_mha.1} parent=5 // pred_check
      _
    $region22: #{cvt_mha.1} parent=5 // pred_check_branch
      %91 = sbr.rel (%p88) target = $region24
    $region23: #{cvt_mha.1} parent=5 // pred_region
      %s92 = ssub.s32 %s7, 1
      %p93 = scmp.lt.s32.totalorder %s12, 7
      %s94 = scalar_select %p93, %s12, 7
      %s95 = smul.addr %s94, 16
      %s96 = smul.addr %s95, 8
      %s97 = scalar_lea.vmem %s0, %s96
      %p98 = pneg %p33
      %p99 = pneg %p30
      %p100 = pneg %p59
      %p101 = pneg %p56
      %p102 = scmp.lt.s32.totalorder %s12, 7
      %s103 = scalar_select %p102, %s12, 7
      %s104 = smul.addr %s103, 16
      %s105 = smul.addr %s104, 8
      %s106 = scalar_lea.vmem %s1, %s105
      %p107 = scmp.lt.s32.totalorder %s12, 7
      %s108 = scalar_select %p107, %s12, 7
      %s109 = smul.addr %s108, 16
      %s110 = smul.addr %s109, 8
      %s111 = scalar_lea.vmem %s0, %s110
      %p112 = scmp.lt.s32.totalorder %s12, 7
      %s113 = scalar_select %p112, %s12, 7
      %s114 = smul.addr %s113, 16
      %s115 = smul.addr %s114, 8
      %s116 = scalar_lea.vmem %s1, %s115
      %v117 = vld [vmem:[%s111] sm:$0xff]
      %v118 = vld [vmem:[%s111 + $0x8] sm:$0xff]
      %v119 = vld [vmem:[%s111 + $0x10] sm:$0xff]
      %v120 = vld [vmem:[%s111 + $0x18] sm:$0xff]
      %v121 = vld [vmem:[%s111 + $0x20] sm:$0xff]
      %v122 = vld [vmem:[%s111 + $0x28] sm:$0xff]
      %v123 = vld [vmem:[%s111 + $0x30] sm:$0xff]
      %v124 = vld [vmem:[%s111 + $0x38] sm:$0xff]
      %v125 = vld [vmem:[%s111 + $0x40] sm:$0xff]
      %v126 = vld [vmem:[%s111 + $0x48] sm:$0xff]
      %v127 = vld [vmem:[%s111 + $0x50] sm:$0xff]
      %v128 = vld [vmem:[%s111 + $0x58] sm:$0xff]
      %v129 = vld [vmem:[%s111 + $0x60] sm:$0xff]
      %v130 = vld [vmem:[%s111 + $0x68] sm:$0xff]
      %v131 = vld [vmem:[%s111 + $0x70] sm:$0xff]
      %v132 = vld [vmem:[%s111 + $0x78] sm:$0xff]
      %133 = vmatprep.subr.mxu0 0.0
      %134 = vmatpush1.xpose.msra.mxu0 %v132
      %135 = vmatprep.subr.mxu0 0.0
      %136 = vmatpush1.xpose.msra.mxu0 %v131
      %137 = vmatprep.subr.mxu0 0.0
      %138 = vmatpush1.xpose.msra.mxu0 %v130
      %139 = vmatprep.subr.mxu0 0.0
      %140 = vmatpush1.xpose.msra.mxu0 %v129
      %141 = vmatprep.subr.mxu0 0.0
      %142 = vmatpush1.xpose.msra.mxu0 %v128
      %143 = vmatprep.subr.mxu0 0.0
      %144 = vmatpush1.xpose.msra.mxu0 %v127
      %145 = vmatprep.subr.mxu0 0.0
      %146 = vmatpush1.xpose.msra.mxu0 %v126
      %147 = vmatprep.subr.mxu0 0.0
      %148 = vmatpush1.xpose.msra.mxu0 %v125
      %149 = vmatprep.subr.mxu0 0.0
      %150 = vmatpush1.xpose.msra.mxu0 %v124
      %151 = vmatprep.subr.mxu0 0.0
      %152 = vmatpush1.xpose.msra.mxu0 %v123
      %153 = vmatprep.subr.mxu0 0.0
      %154 = vmatpush1.xpose.msra.mxu0 %v122
      %155 = vmatprep.subr.mxu0 0.0
      %156 = vmatpush1.xpose.msra.mxu0 %v121
      %157 = vmatprep.subr.mxu0 0.0
      %158 = vmatpush1.xpose.msra.mxu0 %v120
      %159 = vmatprep.subr.mxu0 0.0
      %160 = vmatpush1.xpose.msra.mxu0 %v119
      %161 = vmatprep.subr.mxu0 0.0
      %162 = vmatpush1.xpose.msra.mxu0 %v118
      %163 = vmatprep.subr.mxu0 0.0
      %164 = vmatpush1.xpose.msra.mxu0 %v117
      %165 = vmatprep.subr.mxu0 0.0
      %166 = vmatpush2.xpose.msra.mxu0 0.0
      %167 = vmatprep.subr.mxu0 0.0
      %168 = vmatpush2.xpose.msra.mxu0 0.0
      %169 = vmatprep.subr.mxu0 0.0
      %170 = vmatpush2.xpose.msra.mxu0 0.0
      %171 = vmatprep.subr.mxu0 0.0
      %172 = vmatpush2.xpose.msra.mxu0 0.0
      %173 = vmatprep.subr.mxu0 0.0
      %174 = vmatpush2.xpose.msra.mxu0 0.0
      %175 = vmatprep.subr.mxu0 0.0
      %176 = vmatpush2.xpose.msra.mxu0 0.0
      %177 = vmatprep.subr.mxu0 0.0
      %178 = vmatpush2.xpose.msra.mxu0 0.0
      %179 = vmatprep.subr.mxu0 0.0
      %180 = vmatpush2.xpose.msra.mxu0 0.0
      %181 = vmatprep.subr.mxu0 0.0
      %182 = vmatpush2.xpose.msra.mxu0 0.0
      %183 = vmatprep.subr.mxu0 0.0
      %184 = vmatpush2.xpose.msra.mxu0 0.0
      %185 = vmatprep.subr.mxu0 0.0
      %186 = vmatpush2.xpose.msra.mxu0 0.0
      %187 = vmatprep.subr.mxu0 0.0
      %188 = vmatpush2.xpose.msra.mxu0 0.0
      %189 = vmatprep.subr.mxu0 0.0
      %190 = vmatpush2.xpose.msra.mxu0 0.0
      %191 = vmatprep.subr.mxu0 0.0
      %192 = vmatpush2.xpose.msra.mxu0 0.0
      %193 = vmatprep.subr.mxu0 0.0
      %194 = vmatpush2.xpose.msra.mxu0 0.0
      %195 = vmatprep.subr.mxu0 0.0
      %196 = vmatpush2.xpose.msra.mxu0 0.0
      %197 = vmatprep.mubr.f32.mxu0 0.0
      %198 = vmatmul.mubr.f32.gmra.mxu0 %v117
      %v199 = vpop.f32.mrf.mxu0
      %v200 = vadd.f32 0.0, %v199
      %v201 = vpop.f32.mrf.mxu0
      %202 = vmatprep.mubr.f32.mxu0 0.0
      %203 = vmatmul.mubr.f32.gmra.mxu0 %v118
      %v204 = vpop.f32.mrf.mxu0
      %v205 = vadd.f32 0.0, %v204
      %v206 = vpop.f32.mrf.mxu0
      %207 = vmatprep.mubr.f32.mxu0 0.0
      %208 = vmatmul.mubr.f32.gmra.mxu0 %v119
      %v209 = vpop.f32.mrf.mxu0
      %v210 = vadd.f32 0.0, %v209
      %v211 = vpop.f32.mrf.mxu0
      %212 = vmatprep.mubr.f32.mxu0 0.0
      %213 = vmatmul.mubr.f32.gmra.mxu0 %v120
      %v214 = vpop.f32.mrf.mxu0
      %v215 = vadd.f32 0.0, %v214
      %v216 = vpop.f32.mrf.mxu0
      %217 = vmatprep.mubr.f32.mxu0 0.0
      %218 = vmatmul.mubr.f32.gmra.mxu0 %v121
      %v219 = vpop.f32.mrf.mxu0
      %v220 = vadd.f32 0.0, %v219
      %v221 = vpop.f32.mrf.mxu0
      %222 = vmatprep.mubr.f32.mxu0 0.0
      %223 = vmatmul.mubr.f32.gmra.mxu0 %v122
      %v224 = vpop.f32.mrf.mxu0
      %v225 = vadd.f32 0.0, %v224
      %v226 = vpop.f32.mrf.mxu0
      %227 = vmatprep.mubr.f32.mxu0 0.0
      %228 = vmatmul.mubr.f32.gmra.mxu0 %v123
      %v229 = vpop.f32.mrf.mxu0
      %v230 = vadd.f32 0.0, %v229
      %v231 = vpop.f32.mrf.mxu0
      %232 = vmatprep.mubr.f32.mxu0 0.0
      %233 = vmatmul.mubr.f32.gmra.mxu0 %v124
      %v234 = vpop.f32.mrf.mxu0
      %v235 = vadd.f32 0.0, %v234
      %v236 = vpop.f32.mrf.mxu0
      %237 = vmatprep.mubr.f32.mxu0 0.0
      %238 = vmatmul.mubr.f32.gmra.mxu0 %v125
      %v239 = vpop.f32.mrf.mxu0
      %v240 = vadd.f32 0.0, %v239
      %v241 = vpop.f32.mrf.mxu0
      %242 = vmatprep.mubr.f32.mxu0 0.0
      %243 = vmatmul.mubr.f32.gmra.mxu0 %v126
      %v244 = vpop.f32.mrf.mxu0
      %v245 = vadd.f32 0.0, %v244
      %v246 = vpop.f32.mrf.mxu0
      %247 = vmatprep.mubr.f32.mxu0 0.0
      %248 = vmatmul.mubr.f32.gmra.mxu0 %v127
      %v249 = vpop.f32.mrf.mxu0
      %v250 = vadd.f32 0.0, %v249
      %v251 = vpop.f32.mrf.mxu0
      %252 = vmatprep.mubr.f32.mxu0 0.0
      %253 = vmatmul.mubr.f32.gmra.mxu0 %v128
      %v254 = vpop.f32.mrf.mxu0
      %v255 = vadd.f32 0.0, %v254
      %v256 = vpop.f32.mrf.mxu0
      %257 = vmatprep.mubr.f32.mxu0 0.0
      %258 = vmatmul.mubr.f32.gmra.mxu0 %v129
      %v259 = vpop.f32.mrf.mxu0
      %v260 = vadd.f32 0.0, %v259
      %v261 = vpop.f32.mrf.mxu0
      %262 = vmatprep.mubr.f32.mxu0 0.0
      %263 = vmatmul.mubr.f32.gmra.mxu0 %v130
      %v264 = vpop.f32.mrf.mxu0
      %v265 = vadd.f32 0.0, %v264
      %v266 = vpop.f32.mrf.mxu0
      %267 = vmatprep.mubr.f32.mxu0 0.0
      %268 = vmatmul.mubr.f32.gmra.mxu0 %v131
      %v269 = vpop.f32.mrf.mxu0
      %v270 = vadd.f32 0.0, %v269
      %v271 = vpop.f32.mrf.mxu0
      %272 = vmatprep.mubr.f32.mxu0 0.0
      %273 = vmatmul.mubr.f32.gmra.mxu0 %v132
      %v274 = vpop.f32.mrf.mxu0
      %v275 = vadd.f32 0.0, %v274
      %v276 = vpop.f32.mrf.mxu0
      %277 = vdwg.mxu0
      %v278 = vmul.f32 %v200, 0.5
      %v279 = vmul.f32 %v205, 0.5
      %v280 = vmul.f32 %v210, 0.5
      %v281 = vmul.f32 %v215, 0.5
      %v282 = vmul.f32 %v220, 0.5
      %v283 = vmul.f32 %v225, 0.5
      %v284 = vmul.f32 %v230, 0.5
      %v285 = vmul.f32 %v235, 0.5
      %v286 = vmul.f32 %v240, 0.5
      %v287 = vmul.f32 %v245, 0.5
      %v288 = vmul.f32 %v250, 0.5
      %v289 = vmul.f32 %v255, 0.5
      %v290 = vmul.f32 %v260, 0.5
      %v291 = vmul.f32 %v265, 0.5
      %v292 = vmul.f32 %v270, 0.5
      %v293 = vmul.f32 %v275, 0.5
      %v294 = vlaneseq
      %v295 = vand.u32 %v294, 127
      %vm296 = vcmp.lt.s32.totalorder %v295, 64
      %v297 = vsel %vm296, %v278, -1e+30
      %v298 = vsel %vm296, %v279, -1e+30
      %v299 = vsel %vm296, %v280, -1e+30
      %v300 = vsel %vm296, %v281, -1e+30
      %v301 = vsel %vm296, %v282, -1e+30
      %v302 = vsel %vm296, %v283, -1e+30
      %v303 = vsel %vm296, %v284, -1e+30
      %v304 = vsel %vm296, %v285, -1e+30
      %v305 = vsel %vm296, %v286, -1e+30
      %v306 = vsel %vm296, %v287, -1e+30
      %v307 = vsel %vm296, %v288, -1e+30
      %v308 = vsel %vm296, %v289, -1e+30
      %v309 = vsel %vm296, %v290, -1e+30
      %v310 = vsel %vm296, %v291, -1e+30
      %v311 = vsel %vm296, %v292, -1e+30
      %v312 = vsel %vm296, %v293, -1e+30
      %313 = vmax.xlane.f32.xlu0 %v297
      %v314 = vpop.xlane.xlu0 %313
      %315 = vmax.xlane.f32.xlu0 %v298
      %v316 = vpop.xlane.xlu0 %315
      %317 = vmax.xlane.f32.xlu0 %v299
      %v318 = vpop.xlane.xlu0 %317
      %319 = vmax.xlane.f32.xlu0 %v300
      %v320 = vpop.xlane.xlu0 %319
      %321 = vmax.xlane.f32.xlu0 %v301
      %v322 = vpop.xlane.xlu0 %321
      %323 = vmax.xlane.f32.xlu0 %v302
      %v324 = vpop.xlane.xlu0 %323
      %325 = vmax.xlane.f32.xlu0 %v303
      %v326 = vpop.xlane.xlu0 %325
      %327 = vmax.xlane.f32.xlu0 %v304
      %v328 = vpop.xlane.xlu0 %327
      %329 = vmax.xlane.f32.xlu0 %v305
      %v330 = vpop.xlane.xlu0 %329
      %331 = vmax.xlane.f32.xlu0 %v306
      %v332 = vpop.xlane.xlu0 %331
      %333 = vmax.xlane.f32.xlu0 %v307
      %v334 = vpop.xlane.xlu0 %333
      %335 = vmax.xlane.f32.xlu0 %v308
      %v336 = vpop.xlane.xlu0 %335
      %337 = vmax.xlane.f32.xlu0 %v309
      %v338 = vpop.xlane.xlu0 %337
      %339 = vmax.xlane.f32.xlu0 %v310
      %v340 = vpop.xlane.xlu0 %339
      %341 = vmax.xlane.f32.xlu0 %v311
      %v342 = vpop.xlane.xlu0 %341
      %343 = vmax.xlane.f32.xlu0 %v312
      %v344 = vpop.xlane.xlu0 %343
      %v345 = vsub.f32 %v297, %v314
      %v346 = vsub.f32 %v298, %v316
      %v347 = vsub.f32 %v299, %v318
      %v348 = vsub.f32 %v300, %v320
      %v349 = vsub.f32 %v301, %v322
      %v350 = vsub.f32 %v302, %v324
      %v351 = vsub.f32 %v303, %v326
      %v352 = vsub.f32 %v304, %v328
      %v353 = vsub.f32 %v305, %v330
      %v354 = vsub.f32 %v306, %v332
      %v355 = vsub.f32 %v307, %v334
      %v356 = vsub.f32 %v308, %v336
      %v357 = vsub.f32 %v309, %v338
      %v358 = vsub.f32 %v310, %v340
      %v359 = vsub.f32 %v311, %v342
      %v360 = vsub.f32 %v312, %v344
      %v361 = vmul.f32 %v345, 1.442695
      %v362 = vpow.pop %v361
      %v363 = vmul.f32 %v346, 1.442695
      %v364 = vpow.pop %v363
      %v365 = vmul.f32 %v347, 1.442695
      %v366 = vpow.pop %v365
      %v367 = vmul.f32 %v348, 1.442695
      %v368 = vpow.pop %v367
      %v369 = vmul.f32 %v349, 1.442695
      %v370 = vpow.pop %v369
      %v371 = vmul.f32 %v350, 1.442695
      %v372 = vpow.pop %v371
      %v373 = vmul.f32 %v351, 1.442695
      %v374 = vpow.pop %v373
      %v375 = vmul.f32 %v352, 1.442695
      %v376 = vpow.pop %v375
      %v377 = vmul.f32 %v353, 1.442695
      %v378 = vpow.pop %v377
      %v379 = vmul.f32 %v354, 1.442695
      %v380 = vpow.pop %v379
      %v381 = vmul.f32 %v355, 1.442695
      %v382 = vpow.pop %v381
      %v383 = vmul.f32 %v356, 1.442695
      %v384 = vpow.pop %v383
      %v385 = vmul.f32 %v357, 1.442695
      %v386 = vpow.pop %v385
      %v387 = vmul.f32 %v358, 1.442695
      %v388 = vpow.pop %v387
      %v389 = vmul.f32 %v359, 1.442695
      %v390 = vpow.pop %v389
      %v391 = vmul.f32 %v360, 1.442695
      %v392 = vpow.pop %v391
      %393 = vadd.xlane.f32.xlu0 %v362
      %v394 = vpop.xlane.xlu0 %393
      %395 = vadd.xlane.f32.xlu0 %v364
      %v396 = vpop.xlane.xlu0 %395
      %397 = vadd.xlane.f32.xlu0 %v366
      %v398 = vpop.xlane.xlu0 %397
      %399 = vadd.xlane.f32.xlu0 %v368
      %v400 = vpop.xlane.xlu0 %399
      %401 = vadd.xlane.f32.xlu0 %v370
      %v402 = vpop.xlane.xlu0 %401
      %403 = vadd.xlane.f32.xlu0 %v372
      %v404 = vpop.xlane.xlu0 %403
      %405 = vadd.xlane.f32.xlu0 %v374
      %v406 = vpop.xlane.xlu0 %405
      %407 = vadd.xlane.f32.xlu0 %v376
      %v408 = vpop.xlane.xlu0 %407
      %409 = vadd.xlane.f32.xlu0 %v378
      %v410 = vpop.xlane.xlu0 %409
      %411 = vadd.xlane.f32.xlu0 %v380
      %v412 = vpop.xlane.xlu0 %411
      %413 = vadd.xlane.f32.xlu0 %v382
      %v414 = vpop.xlane.xlu0 %413
      %415 = vadd.xlane.f32.xlu0 %v384
      %v416 = vpop.xlane.xlu0 %415
      %417 = vadd.xlane.f32.xlu0 %v386
      %v418 = vpop.xlane.xlu0 %417
      %419 = vadd.xlane.f32.xlu0 %v388
      %v420 = vpop.xlane.xlu0 %419
      %421 = vadd.xlane.f32.xlu0 %v390
      %v422 = vpop.xlane.xlu0 %421
      %423 = vadd.xlane.f32.xlu0 %v392
      %v424 = vpop.xlane.xlu0 %423
      %425 = vmatprep.subr.mxu0 0.0
      %426 = vmatpush1.msra.mxu0 %v132
      %427 = vmatprep.subr.mxu0 0.0
      %428 = vmatpush1.msra.mxu0 %v131
      %429 = vmatprep.subr.mxu0 0.0
      %430 = vmatpush1.msra.mxu0 %v130
      %431 = vmatprep.subr.mxu0 0.0
      %432 = vmatpush1.msra.mxu0 %v129
      %433 = vmatprep.subr.mxu0 0.0
      %434 = vmatpush1.msra.mxu0 %v128
      %435 = vmatprep.subr.mxu0 0.0
      %436 = vmatpush1.msra.mxu0 %v127
      %437 = vmatprep.subr.mxu0 0.0
      %438 = vmatpush1.msra.mxu0 %v126
      %439 = vmatprep.subr.mxu0 0.0
      %440 = vmatpush1.msra.mxu0 %v125
      %441 = vmatprep.subr.mxu0 0.0
      %442 = vmatpush1.msra.mxu0 %v124
      %443 = vmatprep.subr.mxu0 0.0
      %444 = vmatpush1.msra.mxu0 %v123
      %445 = vmatprep.subr.mxu0 0.0
      %446 = vmatpush1.msra.mxu0 %v122
      %447 = vmatprep.subr.mxu0 0.0
      %448 = vmatpush1.msra.mxu0 %v121
      %449 = vmatprep.subr.mxu0 0.0
      %450 = vmatpush1.msra.mxu0 %v120
      %451 = vmatprep.subr.mxu0 0.0
      %452 = vmatpush1.msra.mxu0 %v119
      %453 = vmatprep.subr.mxu0 0.0
      %454 = vmatpush1.msra.mxu0 %v118
      %455 = vmatprep.subr.mxu0 0.0
      %456 = vmatpush1.msra.mxu0 %v117
      %457 = vmatprep.subr.mxu0 0.0
      %458 = vmatpush2.msra.mxu0 0.0
      %459 = vmatprep.subr.mxu0 0.0
      %460 = vmatpush2.msra.mxu0 0.0
      %461 = vmatprep.subr.mxu0 0.0
      %462 = vmatpush2.msra.mxu0 0.0
      %463 = vmatprep.subr.mxu0 0.0
      %464 = vmatpush2.msra.mxu0 0.0
      %465 = vmatprep.subr.mxu0 0.0
      %466 = vmatpush2.msra.mxu0 0.0
      %467 = vmatprep.subr.mxu0 0.0
      %468 = vmatpush2.msra.mxu0 0.0
      %469 = vmatprep.subr.mxu0 0.0
      %470 = vmatpush2.msra.mxu0 0.0
      %471 = vmatprep.subr.mxu0 0.0
      %472 = vmatpush2.msra.mxu0 0.0
      %473 = vmatprep.subr.mxu0 0.0
      %474 = vmatpush2.msra.mxu0 0.0
      %475 = vmatprep.subr.mxu0 0.0
      %476 = vmatpush2.msra.mxu0 0.0
      %477 = vmatprep.subr.mxu0 0.0
      %478 = vmatpush2.msra.mxu0 0.0
      %479 = vmatprep.subr.mxu0 0.0
      %480 = vmatpush2.msra.mxu0 0.0
      %481 = vmatprep.subr.mxu0 0.0
      %482 = vmatpush2.msra.mxu0 0.0
      %483 = vmatprep.subr.mxu0 0.0
      %484 = vmatpush2.msra.mxu0 0.0
      %485 = vmatprep.subr.mxu0 0.0
      %486 = vmatpush2.msra.mxu0 0.0
      %487 = vmatprep.subr.mxu0 0.0
      %488 = vmatpush2.msra.mxu0 0.0
      %489 = vmatprep.mubr.f32.mxu0 0.0
      %490 = vmatmul.mubr.f32.gmra.mxu0 %v362
      %v491 = vpop.f32.mrf.mxu0
      %v492 = vadd.f32 0.0, %v491
      %v493 = vpop.f32.mrf.mxu0
      %494 = vmatprep.mubr.f32.mxu0 0.0
      %495 = vmatmul.mubr.f32.gmra.mxu0 %v364
      %v496 = vpop.f32.mrf.mxu0
      %v497 = vadd.f32 0.0, %v496
      %v498 = vpop.f32.mrf.mxu0
      %499 = vmatprep.mubr.f32.mxu0 0.0
      %500 = vmatmul.mubr.f32.gmra.mxu0 %v366
      %v501 = vpop.f32.mrf.mxu0
      %v502 = vadd.f32 0.0, %v501
      %v503 = vpop.f32.mrf.mxu0
      %504 = vmatprep.mubr.f32.mxu0 0.0
      %505 = vmatmul.mubr.f32.gmra.mxu0 %v368
      %v506 = vpop.f32.mrf.mxu0
      %v507 = vadd.f32 0.0, %v506
      %v508 = vpop.f32.mrf.mxu0
      %509 = vmatprep.mubr.f32.mxu0 0.0
      %510 = vmatmul.mubr.f32.gmra.mxu0 %v370
      %v511 = vpop.f32.mrf.mxu0
      %v512 = vadd.f32 0.0, %v511
      %v513 = vpop.f32.mrf.mxu0
      %514 = vmatprep.mubr.f32.mxu0 0.0
      %515 = vmatmul.mubr.f32.gmra.mxu0 %v372
      %v516 = vpop.f32.mrf.mxu0
      %v517 = vadd.f32 0.0, %v516
      %v518 = vpop.f32.mrf.mxu0
      %519 = vmatprep.mubr.f32.mxu0 0.0
      %520 = vmatmul.mubr.f32.gmra.mxu0 %v374
      %v521 = vpop.f32.mrf.mxu0
      %v522 = vadd.f32 0.0, %v521
      %v523 = vpop.f32.mrf.mxu0
      %524 = vmatprep.mubr.f32.mxu0 0.0
      %525 = vmatmul.mubr.f32.gmra.mxu0 %v376
      %v526 = vpop.f32.mrf.mxu0
      %v527 = vadd.f32 0.0, %v526
      %v528 = vpop.f32.mrf.mxu0
      %529 = vmatprep.mubr.f32.mxu0 0.0
      %530 = vmatmul.mubr.f32.gmra.mxu0 %v378
      %v531 = vpop.f32.mrf.mxu0
      %v532 = vadd.f32 0.0, %v531
      %v533 = vpop.f32.mrf.mxu0
      %534 = vmatprep.mubr.f32.mxu0 0.0
      %535 = vmatmul.mubr.f32.gmra.mxu0 %v380
      %v536 = vpop.f32.mrf.mxu0
      %v537 = vadd.f32 0.0, %v536
      %v538 = vpop.f32.mrf.mxu0
      %539 = vmatprep.mubr.f32.mxu0 0.0
      %540 = vmatmul.mubr.f32.gmra.mxu0 %v382
      %v541 = vpop.f32.mrf.mxu0
      %v542 = vadd.f32 0.0, %v541
      %v543 = vpop.f32.mrf.mxu0
      %544 = vmatprep.mubr.f32.mxu0 0.0
      %545 = vmatmul.mubr.f32.gmra.mxu0 %v384
      %v546 = vpop.f32.mrf.mxu0
      %v547 = vadd.f32 0.0, %v546
      %v548 = vpop.f32.mrf.mxu0
      %549 = vmatprep.mubr.f32.mxu0 0.0
      %550 = vmatmul.mubr.f32.gmra.mxu0 %v386
      %v551 = vpop.f32.mrf.mxu0
      %v552 = vadd.f32 0.0, %v551
      %v553 = vpop.f32.mrf.mxu0
      %554 = vmatprep.mubr.f32.mxu0 0.0
      %555 = vmatmul.mubr.f32.gmra.mxu0 %v388
      %v556 = vpop.f32.mrf.mxu0
      %v557 = vadd.f32 0.0, %v556
      %v558 = vpop.f32.mrf.mxu0
      %559 = vmatprep.mubr.f32.mxu0 0.0
      %560 = vmatmul.mubr.f32.gmra.mxu0 %v390
      %v561 = vpop.f32.mrf.mxu0
      %v562 = vadd.f32 0.0, %v561
      %v563 = vpop.f32.mrf.mxu0
      %564 = vmatprep.mubr.f32.mxu0 0.0
      %565 = vmatmul.mubr.f32.gmra.mxu0 %v392
      %v566 = vpop.f32.mrf.mxu0
      %v567 = vadd.f32 0.0, %v566
      %v568 = vpop.f32.mrf.mxu0
      %569 = vdwg.mxu0
      %v570 = vrcp.pop %v394
      %v571 = vmul.f32 %v492, %v570
      %v572 = vrcp.pop %v396
      %v573 = vmul.f32 %v497, %v572
      %v574 = vrcp.pop %v398
      %v575 = vmul.f32 %v502, %v574
      %v576 = vrcp.pop %v400
      %v577 = vmul.f32 %v507, %v576
      %v578 = vrcp.pop %v402
      %v579 = vmul.f32 %v512, %v578
      %v580 = vrcp.pop %v404
      %v581 = vmul.f32 %v517, %v580
      %v582 = vrcp.pop %v406
      %v583 = vmul.f32 %v522, %v582
      %v584 = vrcp.pop %v408
      %v585 = vmul.f32 %v527, %v584
      %v586 = vrcp.pop %v410
      %v587 = vmul.f32 %v532, %v586
      %v588 = vrcp.pop %v412
      %v589 = vmul.f32 %v537, %v588
      %v590 = vrcp.pop %v414
      %v591 = vmul.f32 %v542, %v590
      %v592 = vrcp.pop %v416
      %v593 = vmul.f32 %v547, %v592
      %v594 = vrcp.pop %v418
      %v595 = vmul.f32 %v552, %v594
      %v596 = vrcp.pop %v420
      %v597 = vmul.f32 %v557, %v596
      %v598 = vrcp.pop %v422
      %v599 = vmul.f32 %v562, %v598
      %v600 = vrcp.pop %v424
      %v601 = vmul.f32 %v567, %v600
      %602 = vst [vmem:[%s116] sm:$0xff] %v571
      %603 = vst [vmem:[%s116 + $0x8] sm:$0xff] %v573
      %604 = vst [vmem:[%s116 + $0x10] sm:$0xff] %v575
      %605 = vst [vmem:[%s116 + $0x18] sm:$0xff] %v577
      %606 = vst [vmem:[%s116 + $0x20] sm:$0xff] %v579
      %607 = vst [vmem:[%s116 + $0x28] sm:$0xff] %v581
      %608 = vst [vmem:[%s116 + $0x30] sm:$0xff] %v583
      %609 = vst [vmem:[%s116 + $0x38] sm:$0xff] %v585
      %610 = vst [vmem:[%s116 + $0x40] sm:$0xff] %v587
      %611 = vst [vmem:[%s116 + $0x48] sm:$0xff] %v589
      %612 = vst [vmem:[%s116 + $0x50] sm:$0xff] %v591
      %613 = vst [vmem:[%s116 + $0x58] sm:$0xff] %v593
      %614 = vst [vmem:[%s116 + $0x60] sm:$0xff] %v595
      %615 = vst [vmem:[%s116 + $0x68] sm:$0xff] %v597
      %616 = vst [vmem:[%s116 + $0x70] sm:$0xff] %v599
      %617 = vst [vmem:[%s116 + $0x78] sm:$0xff] %v601
      %p618 = scmp.lt.s32.totalorder %s12, 7
      %s619 = scalar_select %p618, %s12, 7
      %s620 = smul.addr %s619, 16
      %s621 = smul.addr %s620, 8
      %s622 = scalar_lea.vmem %s1, %s621
      // Predicated region
      $region25: #{cvt_mha.1} parent=23 // pred_check
        %p623 = pneg %p56
      $region26: #{cvt_mha.1} parent=23 // pred_check_branch
        %625 = sbr.rel (%p623) target = $region28
      $region27: #{cvt_mha.1} parent=23 // pred_region
        _
      $region28: #{cvt_mha.1} parent=23 // pred_fallthru
        _
    $region24: #{cvt_mha.1} parent=5 // pred_fallthru
      _
    %p626 = scmp.le.s32.totalorder 2, %s7
    // Predicated region
    $region29: #{cvt_mha.1} parent=5 // pred_check
      %p627 = pneg %p626
    $region30: #{cvt_mha.1} parent=5 // pred_check_branch
      %629 = sbr.rel (%p627) target = $region32
    $region31: #{cvt_mha.1} parent=5 // pred_region
      %s630 = ssub.s32 %s7, 2
      // Predicated region
      $region33: #{cvt_mha.1} parent=31 // pred_check
        %p631 = pneg %p62
      $region34: #{cvt_mha.1} parent=31 // pred_check_branch
        %633 = sbr.rel (%p631) target = $region36
      $region35: #{cvt_mha.1} parent=31 // pred_region
        %p634 = scmp.lt.s32.totalorder %s13, 7
        %s635 = scalar_select %p634, %s13, 7
        %s636 = smul.addr %s635, 16
        %s637 = smul.addr %s636, 8
        %s638 = scalar_lea.vmem %s1, %s637
      $region36: #{cvt_mha.1} parent=31 // pred_fallthru
        _
    $region32: #{cvt_mha.1} parent=5 // pred_fallthru
      _
  $region6: #{cvt_mha.1} parent=0 // loop_footer
    %s11 = sadd.s32 1, %s7
  $region7: #{cvt_mha.1} parent=0 // loop_footer_branch
    %6 = sbr.rel target = $region3
  $region8: #{cvt_mha.1} parent=0 // loop_exit
    _

</llo_original>
